<compile_context>
chip_gen: v6e
topology: v6e:2x2x1
jax: 0.10.0
libtpu: 0.0.40
codegen_flags: <defaults>
</compile_context>

<pallas_src>
import jax
import jax.numpy as jnp
from jax import lax
from jax.experimental import pallas as pl
from jax.experimental.pallas import tpu as pltpu

EPS = 1e-5
LEAKY_SLOPE = 0.01
HIDDEN = 512


# ----------------------------------------------------------------------------
# Hardware-aware defaults
# ----------------------------------------------------------------------------
def _tpu_generation() -> int:
    try:
        kind = jax.devices()[0].device_kind.lower()
    except Exception:  # pragma: no cover - defensive
        return 0
    for g in (7, 6, 5, 4):
        if f"v{g}" in kind:
            return g
    return 0


def default_tile_n() -> int:
    """Per-generation vocab tile width for the final projection."""
    g = _tpu_generation()
    if g >= 6:
        # v6e / v7x: 512x8192 bf16 tile = 8 MiB; 2 buffers = 16 MiB
        # (vmem_limit_bytes is raised explicitly in the projection call).
        return 8192
    # v5e / unknown: 2x4 MiB W2 buffers fit the 16 MiB default scoped VMEM.
    return 4096


# ----------------------------------------------------------------------------
# Prologue kernel: LayerNorm -> BatchNorm1d -> Linear(D,512) -> LeakyReLU
#                  -> BatchNorm1d(512).  Tiny (B x D, B x 512): one shot.
# ----------------------------------------------------------------------------
def _prologue_kernel(x_ref, lnw_ref, lnb_ref,
                     bn1w_ref, bn1b_ref,
                     w1_ref, b1_ref,
                     bn2w_ref, bn2b_ref,
                     h_ref):
    x = x_ref[...].astype(jnp.float32)

    # LayerNorm over the feature axis (per row).
    mu = jnp.mean(x, axis=-1, keepdims=True)
    var = jnp.mean((x - mu) ** 2, axis=-1, keepdims=True)
    x = (x - mu) * lax.rsqrt(var + EPS)
    x = x * lnw_ref[...] + lnb_ref[...]

    # BatchNorm1d(D), training mode: biased batch statistics.
    bmu = jnp.mean(x, axis=0, keepdims=True)
    bvar = jnp.mean((x - bmu) ** 2, axis=0, keepdims=True)
    x = (x - bmu) * lax.rsqrt(bvar + EPS)
    x = x * bn1w_ref[...] + bn1b_ref[...]

    # Linear(D, 512) + LeakyReLU(0.01).
    h = jnp.dot(x, w1_ref[...], preferred_element_type=jnp.float32)
    h = h + b1_ref[...]
    h = jnp.where(h >= 0, h, LEAKY_SLOPE * h)

    # BatchNorm1d(512), training mode.
    hmu = jnp.mean(h, axis=0, keepdims=True)
    hvar = jnp.mean((h - hmu) ** 2, axis=0, keepdims=True)
    h = (h - hmu) * lax.rsqrt(hvar + EPS)
    h = h * bn2w_ref[...] + bn2b_ref[...]

    h_ref[...] = h.astype(h_ref.dtype)


def _prologue(x, p):
    B, _ = x.shape
    return pl.pallas_call(
        _prologue_kernel,
        out_shape=jax.ShapeDtypeStruct((B, HIDDEN), jnp.bfloat16),
    )(
        x,
        p["ln_w"], p["ln_b"],
        p["bn1_w"], p["bn1_b"],
        p["w1"], p["b1"],
        p["bn2_w"], p["bn2_b"],
    )


# ----------------------------------------------------------------------------
# Final projection kernel: h (B,512) bf16 @ W2 tile (512,tn) bf16 -> f32 logits.
# Pure W2-streaming; grid axis tiles the vocab and is parallel across cores.
# ----------------------------------------------------------------------------
def _proj_kernel(h_ref, w2_ref, b2_ref, o_ref):
    # w2_ref block is (1, HIDDEN, tn): one fully contiguous pre-tiled slab.
    o_ref[...] = (
        jnp.dot(h_ref[...], w2_ref[0], preferred_element_type=jnp.float32)
        + b2_ref[...]
    ).astype(o_ref.dtype)


def prepare_projection(w2_f32, b2_f32, tn):
    """One-time (init) padding + pre-tiling of W2/b2.

    w2_f32: (HIDDEN, N) f32, b2_f32: (1, N) f32.
    Returns (w2_tiled bf16 (n_tiles, HIDDEN, tn), b2_pad f32 (1, n_pad), N).
    Each (HIDDEN, tn) tile is one contiguous HBM block -> single large DMA.
    """
    N = w2_f32.shape[1]
    n_tiles = pl.cdiv(N, tn)
    n_pad = n_tiles * tn
    w2 = w2_f32.astype(jnp.bfloat16)
    b2 = b2_f32
    if n_pad != N:
        w2 = jnp.pad(w2, ((0, 0), (0, n_pad - N)))
        b2 = jnp.pad(b2, ((0, 0), (0, n_pad - N)))
    w2_tiled = w2.reshape(HIDDEN, n_tiles, tn).transpose(1, 0, 2)
    return w2_tiled, b2, N


def next_article_prediction_head(x, params):
    """x: (B, D) float32.  params: dict of weights (see init_params)."""
    B, _ = x.shape

    # Tiny prologue -> h in bf16 (native MXU input dtype).
    h = _prologue(x, params)                     # (B, 512) bf16

    w2_tiled = params["w2_tiled"]                # (n_tiles, 512, tn) bf16
    b2 = params["b2_pad"]                        # (1, n_pad) f32
    N = params["n_out"]
    n_tiles, _, tn = w2_tiled.shape
    n_pad = n_tiles * tn

    # Explicit VMEM budget for the chosen tile/buffer config (+ headroom).
    w2_buf = 2 * HIDDEN * tn * 2                 # double-buffered bf16 W2 tiles
    out_buf = 2 * B * tn * 4                     # double-buffered f32 out tiles
    misc = 2 * (tn * 4 + B * HIDDEN * 2)         # bias + h buffers
    vmem_limit = int(min(max(2 * (w2_buf + out_buf + misc), 16 << 20), 48 << 20))

    # v7x has two TensorCores: shard the vocab axis across them explicitly.
    if _tpu_generation() >= 7 and n_tiles >= 2:
        dim_sem = (pltpu.CORE_PARALLEL,)
    else:
        dim_sem = (pltpu.PARALLEL,)

    cost = pl.CostEstimate(
        flops=2 * B * HIDDEN * n_pad,
        transcendentals=0,
        bytes_accessed=(HIDDEN * n_pad * 2      # W2 (bf16)
                        + B * HIDDEN * 2        # h  (bf16)
                        + n_pad * 4             # b2 (f32)
                        + B * n_pad * 4),       # logits out (f32)
    )

    out = pl.pallas_call(
        _proj_kernel,
        out_shape=jax.ShapeDtypeStruct((B, n_pad), jnp.float32),
        grid_spec=pltpu.PrefetchScalarGridSpec(
            num_scalar_prefetch=0,
            grid=(n_tiles,),
            in_specs=[
                # h is tiny and grid-invariant.
                pl.BlockSpec((B, HIDDEN), lambda j: (0, 0)),
                # W2 stream: one contiguous pre-tiled slab per step,
                # double-buffered (big tiles already saturate HBM).
                pl.BlockSpec((1, HIDDEN, tn), lambda j: (j, 0, 0),
                             pipeline_mode=pl.Buffered(2)),
                pl.BlockSpec((1, tn), lambda j: (0, j)),
            ],
            out_specs=pl.BlockSpec((B, tn), lambda j: (0, j)),
        ),
        compiler_params=pltpu.CompilerParams(
            dimension_semantics=dim_sem,
            vmem_limit_bytes=vmem_limit,
        ),
        cost_estimate=cost,
    )(h, w2_tiled, b2)

    return out[:, :N]


# ----------------------------------------------------------------------------
# Params / references
# ----------------------------------------------------------------------------
def init_params(key, input_size, output_size, tn=None):
    """Deterministic synthetic init (PyTorch-default-style).

    W2 is padded + pre-tiled + bf16-cast HERE, once, so the forward pass never
    touches the full W2 outside the streaming kernel.
    """
    if tn is None:
        tn = default_tile_n()
    k1, k2, k3, k4, k5, k6 = jax.random.split(key, 6)
    bound1 = 1.0 / jnp.sqrt(input_size)
    bound2 = 1.0 / jnp.sqrt(HIDDEN)
    w2_f32 = jax.random.uniform(k3, (HIDDEN, output_size), jnp.float32,
                                -bound2, bound2)
    b2_f32 = jax.random.uniform(k4, (1, output_size), jnp.float32,
                                -bound2, bound2)
    w2_tiled, b2_pad, n_out = prepare_projection(w2_f32, b2_f32, tn)
    return {
        "ln_w": 1.0 + 0.1 * jax.random.normal(k5, (1, input_size), jnp.float32),
        "ln_b": 0.1 * jax.random.normal(k6, (1, input_size), jnp.float32),
        "bn1_w": jnp.ones((1, input_size), jnp.float32),
        "bn1_b": jnp.zeros((1, input_size), jnp.float32),
        # Linear(D, 512): stored as (in, out), kept f32 (tiny).
        "w1": jax.random.uniform(k1, (input_size, HIDDEN), jnp.float32,
                                 -bound1, bound1),
        "b1": jax.random.uniform(k2, (1, HIDDEN), jnp.float32, -bound1, bound1),
        "bn2_w": jnp.ones((1, HIDDEN), jnp.float32),
        "bn2_b": jnp.zeros((1, HIDDEN), jnp.float32),
        # Linear(512, output_size): bf16 weights, padded + pre-tiled at init
        # (HBM-bandwidth-bound stream), f32 accumulation in the kernel.
        "w2_tiled": w2_tiled,        # (n_tiles, 512, tn) bf16
        "b2_pad": b2_pad,            # (1, n_pad) f32
        "n_out": n_out,
        # f32 copies only for the references below (not used by the kernel).
        "w2_f32": w2_f32,
        "b2": b2_f32,
    }


def _prologue_ref(x, p):
    mu = jnp.mean(x, axis=-1, keepdims=True)
    var = jnp.mean((x - mu) ** 2, axis=-1, keepdims=True)
    x = (x - mu) / jnp.sqrt(var + EPS) * p["ln_w"] + p["ln_b"]

    bmu = jnp.mean(x, axis=0, keepdims=True)
    bvar = jnp.mean((x - bmu) ** 2, axis=0, keepdims=True)
    x = (x - bmu) / jnp.sqrt(bvar + EPS) * p["bn1_w"] + p["bn1_b"]

    h = x @ p["w1"] + p["b1"]
    h = jnp.where(h >= 0, h, LEAKY_SLOPE * h)

    hmu = jnp.mean(h, axis=0, keepdims=True)
    hvar = jnp.mean((h - hmu) ** 2, axis=0, keepdims=True)
    return (h - hmu) / jnp.sqrt(hvar + EPS) * p["bn2_w"] + p["bn2_b"]


def reference_forward_f32(x, p):
    """Pure-f32 JAX reference matching PyTorch training-mode forward."""
    h = _prologue_ref(x, p)
    return h @ p["w2_f32"] + p["b2"]


def reference_forward_matched(x, p):
    """Reference mirroring the kernel's bf16 h / bf16 W2 (f32 accumulate)."""
    h = _prologue_ref(x, p)
    h_bf = h.astype(jnp.bfloat16).astype(jnp.float32)
    w2 = p["w2_f32"].astype(jnp.bfloat16).astype(jnp.float32)
    return h_bf @ w2 + p["b2"]


# TODO(synk): PyTorch training-mode BatchNorm also updates running_mean/var
# buffers as a side effect; only the forward output is reproduced here.

if __name__ == "__main__":
    B = 8                # batch
    INPUT_SIZE = 32      # transformer hidden size feeding the head
    # len(articleId_index) is ~100k in the original; small synthetic vocab.
    OUTPUT_SIZE = 5000
    # Small tile for the demo so the grid has several steps and the vocab pad
    # path is exercised; real-size vocabs should use default_tile_n().
    TILE_N = 1024

    key = jax.random.PRNGKey(0)
    kx, kp = jax.random.split(key)
    x = jax.random.normal(kx, (B, INPUT_SIZE), jnp.float32)
    params = init_params(kp, INPUT_SIZE, OUTPUT_SIZE, tn=TILE_N)

    out = next_article_prediction_head(x, params)
    out = jax.block_until_ready(out)
    assert out.shape == (B, OUTPUT_SIZE)

    # Tight check vs a reference that matches the kernel's bf16 casts.
    ref_m = reference_forward_matched(x, params)
    assert jnp.allclose(out, ref_m, atol=3e-3, rtol=3e-3), (
        float(jnp.max(jnp.abs(out - ref_m))))

    # Loose sanity check vs the full-f32 PyTorch-equivalent reference
    # (difference is only the bf16 quantization of W2 / h).
    ref_f = reference_forward_f32(x, params)
    assert jnp.allclose(out, ref_f, atol=5e-2, rtol=5e-2), (
        float(jnp.max(jnp.abs(out - ref_f))))

    print("KERNEL_OK")
</pallas_src>

<mosaic_0001>
module attributes {stable_mosaic.version = 11 : i64} {
  func.func @_prologue_kernel(%arg0: memref<8x32xf32, #tpu.memory_space<vmem>>, %arg1: memref<1x32xf32, #tpu.memory_space<vmem>>, %arg2: memref<1x32xf32, #tpu.memory_space<vmem>>, %arg3: memref<1x32xf32, #tpu.memory_space<vmem>>, %arg4: memref<1x32xf32, #tpu.memory_space<vmem>>, %arg5: memref<32x512xf32, #tpu.memory_space<vmem>>, %arg6: memref<1x512xf32, #tpu.memory_space<vmem>>, %arg7: memref<1x512xf32, #tpu.memory_space<vmem>>, %arg8: memref<1x512xf32, #tpu.memory_space<vmem>>, %arg9: memref<8x512xbf16, #tpu.memory_space<vmem>>) attributes {dimension_semantics = [], scalar_prefetch = 0 : i64, scratch_operands = 0 : i64, tpu.core_type = #tpu.core_type<tc>} {
    %c0 = arith.constant 0 : index
    %c0_0 = arith.constant 0 : index
    %0 = vector.load %arg0[%c0, %c0_0] : memref<8x32xf32, #tpu.memory_space<vmem>>, vector<8x32xf32>
    %cst = arith.constant dense<0.000000e+00> : vector<8xf32>
    %1 = vector.multi_reduction <add>, %0, %cst [1] : vector<8x32xf32> to vector<8xf32>
    %2 = vector.shape_cast %1 : vector<8xf32> to vector<8x1xf32>
    %cst_1 = arith.constant 3.200000e+01 : f32
    %3 = vector.broadcast %cst_1 : f32 to vector<8x1xf32>
    %4 = arith.divf %2, %3 : vector<8x1xf32>
    %5 = vector.broadcast %4 : vector<8x1xf32> to vector<8x32xf32>
    %6 = arith.subf %0, %5 : vector<8x32xf32>
    %7 = arith.mulf %6, %6 : vector<8x32xf32>
    %cst_2 = arith.constant dense<0.000000e+00> : vector<8xf32>
    %8 = vector.multi_reduction <add>, %7, %cst_2 [1] : vector<8x32xf32> to vector<8xf32>
    %9 = vector.shape_cast %8 : vector<8xf32> to vector<8x1xf32>
    %cst_3 = arith.constant 3.200000e+01 : f32
    %10 = vector.broadcast %cst_3 : f32 to vector<8x1xf32>
    %11 = arith.divf %9, %10 : vector<8x1xf32>
    %12 = vector.broadcast %4 : vector<8x1xf32> to vector<8x32xf32>
    %13 = arith.subf %0, %12 : vector<8x32xf32>
    %cst_4 = arith.constant 9.99999974E-6 : f32
    %14 = vector.broadcast %cst_4 : f32 to vector<8x1xf32>
    %15 = arith.addf %11, %14 : vector<8x1xf32>
    %16 = math.rsqrt %15 : vector<8x1xf32>
    %17 = vector.broadcast %16 : vector<8x1xf32> to vector<8x32xf32>
    %18 = arith.mulf %13, %17 : vector<8x32xf32>
    %c0_5 = arith.constant 0 : index
    %c0_6 = arith.constant 0 : index
    %19 = vector.load %arg1[%c0_5, %c0_6] : memref<1x32xf32, #tpu.memory_space<vmem>>, vector<1x32xf32>
    %20 = vector.broadcast %19 : vector<1x32xf32> to vector<8x32xf32>
    %21 = arith.mulf %18, %20 : vector<8x32xf32>
    %c0_7 = arith.constant 0 : index
    %c0_8 = arith.constant 0 : index
    %22 = vector.load %arg2[%c0_7, %c0_8] : memref<1x32xf32, #tpu.memory_space<vmem>>, vector<1x32xf32>
    %23 = vector.broadcast %22 : vector<1x32xf32> to vector<8x32xf32>
    %24 = arith.addf %21, %23 : vector<8x32xf32>
    %cst_9 = arith.constant dense<0.000000e+00> : vector<32xf32>
    %25 = vector.multi_reduction <add>, %24, %cst_9 [0] : vector<8x32xf32> to vector<32xf32>
    %26 = vector.shape_cast %25 : vector<32xf32> to vector<1x32xf32>
    %cst_10 = arith.constant 8.000000e+00 : f32
    %27 = vector.broadcast %cst_10 : f32 to vector<1x32xf32>
    %28 = arith.divf %26, %27 : vector<1x32xf32>
    %29 = vector.broadcast %28 : vector<1x32xf32> to vector<8x32xf32>
    %30 = arith.subf %24, %29 : vector<8x32xf32>
    %31 = arith.mulf %30, %30 : vector<8x32xf32>
    %cst_11 = arith.constant dense<0.000000e+00> : vector<32xf32>
    %32 = vector.multi_reduction <add>, %31, %cst_11 [0] : vector<8x32xf32> to vector<32xf32>
    %33 = vector.shape_cast %32 : vector<32xf32> to vector<1x32xf32>
    %cst_12 = arith.constant 8.000000e+00 : f32
    %34 = vector.broadcast %cst_12 : f32 to vector<1x32xf32>
    %35 = arith.divf %33, %34 : vector<1x32xf32>
    %36 = vector.broadcast %28 : vector<1x32xf32> to vector<8x32xf32>
    %37 = arith.subf %24, %36 : vector<8x32xf32>
    %cst_13 = arith.constant 9.99999974E-6 : f32
    %38 = vector.broadcast %cst_13 : f32 to vector<1x32xf32>
    %39 = arith.addf %35, %38 : vector<1x32xf32>
    %40 = math.rsqrt %39 : vector<1x32xf32>
    %41 = vector.broadcast %40 : vector<1x32xf32> to vector<8x32xf32>
    %42 = arith.mulf %37, %41 : vector<8x32xf32>
    %c0_14 = arith.constant 0 : index
    %c0_15 = arith.constant 0 : index
    %43 = vector.load %arg3[%c0_14, %c0_15] : memref<1x32xf32, #tpu.memory_space<vmem>>, vector<1x32xf32>
    %44 = vector.broadcast %43 : vector<1x32xf32> to vector<8x32xf32>
    %45 = arith.mulf %42, %44 : vector<8x32xf32>
    %c0_16 = arith.constant 0 : index
    %c0_17 = arith.constant 0 : index
    %46 = vector.load %arg4[%c0_16, %c0_17] : memref<1x32xf32, #tpu.memory_space<vmem>>, vector<1x32xf32>
    %47 = vector.broadcast %46 : vector<1x32xf32> to vector<8x32xf32>
    %48 = arith.addf %45, %47 : vector<8x32xf32>
    %c0_18 = arith.constant 0 : index
    %c0_19 = arith.constant 0 : index
    %49 = vector.load %arg5[%c0_18, %c0_19] : memref<32x512xf32, #tpu.memory_space<vmem>>, vector<32x512xf32>
    %cst_20 = arith.constant dense<0.000000e+00> : vector<8x512xf32>
    %50 = tpu.matmul %48, %49, %cst_20 {dimension_numbers = #tpu.dot_dimension_numbers<[1], [0], [0], [1], [0, 0, 1, 1], [], []>} : vector<8x32xf32>, vector<32x512xf32>, vector<8x512xf32> -> vector<8x512xf32>
    %c0_21 = arith.constant 0 : index
    %c0_22 = arith.constant 0 : index
    %51 = vector.load %arg6[%c0_21, %c0_22] : memref<1x512xf32, #tpu.memory_space<vmem>>, vector<1x512xf32>
    %52 = vector.broadcast %51 : vector<1x512xf32> to vector<8x512xf32>
    %53 = arith.addf %50, %52 : vector<8x512xf32>
    %cst_23 = arith.constant 0.000000e+00 : f32
    %54 = vector.broadcast %cst_23 : f32 to vector<8x512xf32>
    %55 = arith.cmpf oge, %53, %54 : vector<8x512xf32>
    %cst_24 = arith.constant 0.00999999977 : f32
    %56 = vector.broadcast %cst_24 : f32 to vector<8x512xf32>
    %57 = arith.mulf %56, %53 : vector<8x512xf32>
    %58 = arith.select %55, %53, %57 : vector<8x512xi1>, vector<8x512xf32>
    %cst_25 = arith.constant dense<0.000000e+00> : vector<512xf32>
    %59 = vector.multi_reduction <add>, %58, %cst_25 [0] : vector<8x512xf32> to vector<512xf32>
    %60 = vector.shape_cast %59 : vector<512xf32> to vector<1x512xf32>
    %cst_26 = arith.constant 8.000000e+00 : f32
    %61 = vector.broadcast %cst_26 : f32 to vector<1x512xf32>
    %62 = arith.divf %60, %61 : vector<1x512xf32>
    %63 = vector.broadcast %62 : vector<1x512xf32> to vector<8x512xf32>
    %64 = arith.subf %58, %63 : vector<8x512xf32>
    %65 = arith.mulf %64, %64 : vector<8x512xf32>
    %cst_27 = arith.constant dense<0.000000e+00> : vector<512xf32>
    %66 = vector.multi_reduction <add>, %65, %cst_27 [0] : vector<8x512xf32> to vector<512xf32>
    %67 = vector.shape_cast %66 : vector<512xf32> to vector<1x512xf32>
    %cst_28 = arith.constant 8.000000e+00 : f32
    %68 = vector.broadcast %cst_28 : f32 to vector<1x512xf32>
    %69 = arith.divf %67, %68 : vector<1x512xf32>
    %70 = vector.broadcast %62 : vector<1x512xf32> to vector<8x512xf32>
    %71 = arith.subf %58, %70 : vector<8x512xf32>
    %cst_29 = arith.constant 9.99999974E-6 : f32
    %72 = vector.broadcast %cst_29 : f32 to vector<1x512xf32>
    %73 = arith.addf %69, %72 : vector<1x512xf32>
    %74 = math.rsqrt %73 : vector<1x512xf32>
    %75 = vector.broadcast %74 : vector<1x512xf32> to vector<8x512xf32>
    %76 = arith.mulf %71, %75 : vector<8x512xf32>
    %c0_30 = arith.constant 0 : index
    %c0_31 = arith.constant 0 : index
    %77 = vector.load %arg7[%c0_30, %c0_31] : memref<1x512xf32, #tpu.memory_space<vmem>>, vector<1x512xf32>
    %78 = vector.broadcast %77 : vector<1x512xf32> to vector<8x512xf32>
    %79 = arith.mulf %76, %78 : vector<8x512xf32>
    %c0_32 = arith.constant 0 : index
    %c0_33 = arith.constant 0 : index
    %80 = vector.load %arg8[%c0_32, %c0_33] : memref<1x512xf32, #tpu.memory_space<vmem>>, vector<1x512xf32>
    %81 = vector.broadcast %80 : vector<1x512xf32> to vector<8x512xf32>
    %82 = arith.addf %79, %81 : vector<8x512xf32>
    %83 = arith.truncf %82 : vector<8x512xf32> to vector<8x512xbf16>
    %c0_34 = arith.constant 0 : index
    %c0_35 = arith.constant 0 : index
    %84 = vector.load %arg9[%c0_34, %c0_35] : memref<8x512xbf16, #tpu.memory_space<vmem>>, vector<8x512xbf16>
    tpu.vector_store %arg9[%c0_34, %c0_35], %83 {strides = array<i32>} : memref<8x512xbf16, #tpu.memory_space<vmem>>, vector<8x512xbf16>,
    return
  }
}

</mosaic_0001>

<llo_original>
// kernel: tpu_custom_call.1
$region0: #{tpu_custom_call.1}
  #allocation0 [shape = 'u32[]', space=smem, size = 0x4, offset = 0x4, fixed_abs, tag = 'smem constant byte address 0x4 - core index']
  #allocation1 [shape = 'u32[144,128]{1,0:T(1,128)}', space=vmem, size = 0x12000, scoped, tag = 'internal scratch']
  %s0 = inlined_call_operand.hbm [shape: f32[8,32], index: 0, kind: input, shape index: {}]
  %s1 = inlined_call_operand.hbm [shape: f32[1,32], index: 1, kind: input, shape index: {}]
  %s2 = inlined_call_operand.hbm [shape: f32[1,32], index: 2, kind: input, shape index: {}]
  %s3 = inlined_call_operand.hbm [shape: f32[1,32], index: 3, kind: input, shape index: {}]
  %s4 = inlined_call_operand.hbm [shape: f32[1,32], index: 4, kind: input, shape index: {}]
  %s5 = inlined_call_operand.hbm [shape: f32[32,512], index: 5, kind: input, shape index: {}]
  %s6 = inlined_call_operand.vmem [shape: f32[1,512], index: 6, kind: input, shape index: {}]
  %s7 = inlined_call_operand.vmem [shape: f32[1,512], index: 7, kind: input, shape index: {}]
  %s8 = inlined_call_operand.vmem [shape: f32[1,512], index: 8, kind: input, shape index: {}]
  %s9 = inlined_call_operand.hbm [shape: bf16[8,512], index: 9, kind: output, shape index: {}]
  %s10 = sld [smem:[#allocation0]]
  $region70: #{tpu_custom_call.1} parent=0
    _
  %s12 = ssub.s32 1, %s10
  %s13 = scalar_select 0, %s12, %s10
  $region1: #{tpu_custom_call.1} parent=0
    #allocation2 [shape = 'u8[4096]{0}', space=vmem, size = 0x1000, scoped, tag = 'input window, operand 0, single buffered']
    #allocation3 [shape = 's32[1]{0}', space=sflag, size = 0x4, scoped, tag = 'scoped memory for tpu_custom_call.1']
    #allocation4 [shape = 's32[1]{0}', space=sflag, size = 0x4, scoped, tag = 'scoped memory for tpu_custom_call.1']
    #allocation5 [shape = 'u8[512]{0}', space=vmem, size = 0x400, scoped, tag = 'input window, operand 1, single buffered']
    #allocation6 [shape = 's32[1]{0}', space=sflag, size = 0x4, scoped, tag = 'scoped memory for tpu_custom_call.1']
    #allocation7 [shape = 'u8[512]{0}', space=vmem, size = 0x400, scoped, tag = 'input window, operand 2, single buffered']
    #allocation8 [shape = 'u8[512]{0}', space=vmem, size = 0x400, scoped, tag = 'input window, operand 3, single buffered']
    #allocation9 [shape = 's32[1]{0}', space=sflag, size = 0x4, scoped, tag = 'scoped memory for tpu_custom_call.1']
    #allocation10 [shape = 'u8[512]{0}', space=vmem, size = 0x400, scoped, tag = 'input window, operand 4, single buffered']
    #allocation11 [shape = 'u8[65536]{0}', space=vmem, size = 0x10000, scoped, tag = 'input window, operand 5, single buffered']
    #allocation12 [shape = 's32[1]{0}', space=sflag, size = 0x4, scoped, tag = 'scoped memory for tpu_custom_call.1']
    #allocation13 [shape = 'u8[8192]{0}', space=vmem, size = 0x2000, scoped, tag = 'output window, operand 0, single buffered']
    %14 = vsyncpa [#allocation3], 0
    %15 = vsyncpa [#allocation6], 0
    %16 = vsyncpa [#allocation9], 0
    %17 = vsyncpa [#allocation12], 0
    %18 = vsyncpa [#allocation4], 0
    // Predicated region
    $region2: #{tpu_custom_call.1} parent=1 // pred_check
      _
    $region3: #{tpu_custom_call.1} parent=1 // pred_check_branch
      %20 = sbr.rel (0) target = $region5
    $region4: #{tpu_custom_call.1} parent=1 // pred_region
      %s22 = ssub.s32 128, 128
      %23 = vsyncadd [#allocation3], %s22
      %s25 = sshll.u32 [#allocation2], 4
      %s26 = int_to_ptr.vmem [resolvable:$true] %s25
      %28 = dma.hbm_to_vmem [thread:$0]  %s0, 128, %s26, [#allocation3]
    $region5: #{tpu_custom_call.1} parent=1 // pred_fallthru
      _
    // Predicated region
    $region6: #{tpu_custom_call.1} parent=1 // pred_check
      _
    $region7: #{tpu_custom_call.1} parent=1 // pred_check_branch
      %30 = sbr.rel (0) target = $region9
    $region8: #{tpu_custom_call.1} parent=1 // pred_region
      %s32 = ssub.s32 16, 16
      %33 = vsyncadd [#allocation6], %s32
      %s35 = sshll.u32 [#allocation5], 4
      %s36 = int_to_ptr.vmem [resolvable:$true] %s35
      %38 = dma.hbm_to_vmem [thread:$0]  %s1, 16, %s36, [#allocation6]
    $region9: #{tpu_custom_call.1} parent=1 // pred_fallthru
      _
    // Predicated region
    $region10: #{tpu_custom_call.1} parent=1 // pred_check
      _
    $region11: #{tpu_custom_call.1} parent=1 // pred_check_branch
      %40 = sbr.rel (0) target = $region13
    $region12: #{tpu_custom_call.1} parent=1 // pred_region
      %s42 = ssub.s32 16, 16
      %43 = vsyncadd [#allocation6], %s42
      %s45 = sshll.u32 [#allocation7], 4
      %s46 = int_to_ptr.vmem [resolvable:$true] %s45
      %48 = dma.hbm_to_vmem [thread:$0]  %s2, 16, %s46, [#allocation6]
    $region13: #{tpu_custom_call.1} parent=1 // pred_fallthru
      _
    // Predicated region
    $region14: #{tpu_custom_call.1} parent=1 // pred_check
      _
    $region15: #{tpu_custom_call.1} parent=1 // pred_check_branch
      %50 = sbr.rel (0) target = $region17
    $region16: #{tpu_custom_call.1} parent=1 // pred_region
      %s52 = ssub.s32 16, 16
      %53 = vsyncadd [#allocation9], %s52
      %s55 = sshll.u32 [#allocation8], 4
      %s56 = int_to_ptr.vmem [resolvable:$true] %s55
      %58 = dma.hbm_to_vmem [thread:$0]  %s3, 16, %s56, [#allocation9]
    $region17: #{tpu_custom_call.1} parent=1 // pred_fallthru
      _
    // Predicated region
    $region18: #{tpu_custom_call.1} parent=1 // pred_check
      _
    $region19: #{tpu_custom_call.1} parent=1 // pred_check_branch
      %60 = sbr.rel (0) target = $region21
    $region20: #{tpu_custom_call.1} parent=1 // pred_region
      %s62 = ssub.s32 16, 16
      %63 = vsyncadd [#allocation9], %s62
      %s65 = sshll.u32 [#allocation10], 4
      %s66 = int_to_ptr.vmem [resolvable:$true] %s65
      %68 = dma.hbm_to_vmem [thread:$0]  %s4, 16, %s66, [#allocation9]
    $region21: #{tpu_custom_call.1} parent=1 // pred_fallthru
      _
    // Predicated region
    $region22: #{tpu_custom_call.1} parent=1 // pred_check
      _
    $region23: #{tpu_custom_call.1} parent=1 // pred_check_branch
      %70 = sbr.rel (0) target = $region25
    $region24: #{tpu_custom_call.1} parent=1 // pred_region
      %s72 = ssub.s32 2048, 2048
      %73 = vsyncadd [#allocation12], %s72
      %s74 = sshll.u32 [#allocation11], 4
      %s75 = int_to_ptr.vmem [resolvable:$true] %s74
      %80 = dma.hbm_to_vmem [thread:$0]  %s5, 2048, %s75, [#allocation12], 512, 512, 32
    $region25: #{tpu_custom_call.1} parent=1 // pred_fallthru
      _
    // Predicated region
    $region26: #{tpu_custom_call.1} parent=1 // pred_check
      _
    $region27: #{tpu_custom_call.1} parent=1 // pred_check_branch
      %82 = sbr.rel (0) target = $region29
    $region28: #{tpu_custom_call.1} parent=1 // pred_region
      _
    $region29: #{tpu_custom_call.1} parent=1 // pred_fallthru
      _
    // Predicated region
    $region30: #{tpu_custom_call.1} parent=1 // pred_check
      _
    $region31: #{tpu_custom_call.1} parent=1 // pred_check_branch
      %84 = sbr.rel (0) target = $region33
    $region32: #{tpu_custom_call.1} parent=1 // pred_region
      _
    $region33: #{tpu_custom_call.1} parent=1 // pred_fallthru
      _
    // Predicated region
    $region34: #{tpu_custom_call.1} parent=1 // pred_check
      _
    $region35: #{tpu_custom_call.1} parent=1 // pred_check_branch
      %86 = sbr.rel (0) target = $region37
    $region36: #{tpu_custom_call.1} parent=1 // pred_region
      _
    $region37: #{tpu_custom_call.1} parent=1 // pred_fallthru
      _
    // Predicated region
    $region38: #{tpu_custom_call.1} parent=1 // pred_check
      _
    $region39: #{tpu_custom_call.1} parent=1 // pred_check_branch
      %88 = sbr.rel (0) target = $region41
    $region40: #{tpu_custom_call.1} parent=1 // pred_region
      %89 = dma.done [#allocation3], 128
    $region41: #{tpu_custom_call.1} parent=1 // pred_fallthru
      _
    // Predicated region
    $region42: #{tpu_custom_call.1} parent=1 // pred_check
      _
    $region43: #{tpu_custom_call.1} parent=1 // pred_check_branch
      %91 = sbr.rel (0) target = $region45
    $region44: #{tpu_custom_call.1} parent=1 // pred_region
      %92 = dma.done [#allocation6], 16
    $region45: #{tpu_custom_call.1} parent=1 // pred_fallthru
      _
    // Predicated region
    $region46: #{tpu_custom_call.1} parent=1 // pred_check
      _
    $region47: #{tpu_custom_call.1} parent=1 // pred_check_branch
      %94 = sbr.rel (0) target = $region49
    $region48: #{tpu_custom_call.1} parent=1 // pred_region
      %95 = dma.done [#allocation6], 16
    $region49: #{tpu_custom_call.1} parent=1 // pred_fallthru
      _
    // Predicated region
    $region50: #{tpu_custom_call.1} parent=1 // pred_check
      _
    $region51: #{tpu_custom_call.1} parent=1 // pred_check_branch
      %97 = sbr.rel (0) target = $region53
    $region52: #{tpu_custom_call.1} parent=1 // pred_region
      %98 = dma.done [#allocation9], 16
    $region53: #{tpu_custom_call.1} parent=1 // pred_fallthru
      _
    // Predicated region
    $region54: #{tpu_custom_call.1} parent=1 // pred_check
      _
    $region55: #{tpu_custom_call.1} parent=1 // pred_check_branch
      %100 = sbr.rel (0) target = $region57
    $region56: #{tpu_custom_call.1} parent=1 // pred_region
      %101 = dma.done [#allocation9], 16
    $region57: #{tpu_custom_call.1} parent=1 // pred_fallthru
      _
    // Predicated region
    $region58: #{tpu_custom_call.1} parent=1 // pred_check
      _
    $region59: #{tpu_custom_call.1} parent=1 // pred_check_branch
      %103 = sbr.rel (0) target = $region61
    $region60: #{tpu_custom_call.1} parent=1 // pred_region
      %104 = dma.done [#allocation12], 2048
    $region61: #{tpu_custom_call.1} parent=1 // pred_fallthru
      _
    %v105 = vld [vmem:[#allocation2] sm:$0xff]
    %vm106 = vcmask 261120
    %v107 = vsel %vm106, %v105, 0.0
    %108 = vadd.xlane.f32.xlu0 %v107
    %v109 = vpop.xlane.xlu0 %108
    %v110 = vrcp.pop 32.0
    %v111 = vmul.f32 %v109, %v110
    %v112 = vsub.f32 %v105, %v111
    %v113 = vmul.f32 %v112, %v112
    %v114 = vsel %vm106, %v113, 0.0
    %115 = vadd.xlane.f32.xlu0 %v114
    %v116 = vpop.xlane.xlu0 %115
    %v117 = vmul.f32 %v116, %v110
    %v118 = vadd.f32 %v117, 1e-05
    %v119 = vrsqrt.pop %v118
    %v120 = vmul.f32 %v112, %v119
    %v121 = vld [vmem:[#allocation5] sm:$0x1]
    %v123 = vlaneseq
    %v124 = vshrl.u32 %v123, 7
    %v125 = vsub.s32 0, %v124
    %v126 = vrot.slane %v121, %v125
    %v128 = vmul.f32 %v120, %v126
    %v129 = vld [vmem:[#allocation7] sm:$0x1]
    %v131 = vlaneseq
    %v132 = vshrl.u32 %v131, 7
    %v133 = vsub.s32 0, %v132
    %v134 = vrot.slane %v129, %v133
    %v136 = vadd.f32 %v128, %v134
    %v137 = vsel %vm106, %v136, 0.0
    %v138 = vrot.slane %v137, 4
    %v139 = vadd.f32 %v137, %v138
    %v140 = vrot.slane %v139, 2
    %v141 = vadd.f32 %v139, %v140
    %v142 = vrot.slane %v141, 1
    %v143 = vadd.f32 %v141, %v142
    %v144 = vrcp.pop 8.0
    %v145 = vmul.f32 %v143, %v144
    %v146 = vsub.f32 %v136, %v145
    %v147 = vmul.f32 %v146, %v146
    %v148 = vsel %vm106, %v147, 0.0
    %v149 = vrot.slane %v148, 4
    %v150 = vadd.f32 %v148, %v149
    %v151 = vrot.slane %v150, 2
    %v152 = vadd.f32 %v150, %v151
    %v153 = vrot.slane %v152, 1
    %v154 = vadd.f32 %v152, %v153
    %v155 = vmul.f32 %v154, %v144
    %v156 = vadd.f32 %v155, 1e-05
    %v157 = vrsqrt.pop %v156
    %v158 = vmul.f32 %v146, %v157
    %v159 = vld [vmem:[#allocation8] sm:$0x1]
    %v161 = vlaneseq
    %v162 = vshrl.u32 %v161, 7
    %v163 = vsub.s32 0, %v162
    %v164 = vrot.slane %v159, %v163
    %v166 = vmul.f32 %v158, %v164
    %v167 = vld [vmem:[#allocation10] sm:$0x1]
    %v169 = vlaneseq
    %v170 = vshrl.u32 %v169, 7
    %v171 = vsub.s32 0, %v170
    %v172 = vrot.slane %v167, %v171
    %v174 = vadd.f32 %v166, %v172
    %v175 = vld [vmem:[#allocation11] sm:$0xff]
    %v176 = vld [vmem:[#allocation11 + $0x8] sm:$0xff]
    %v177 = vld [vmem:[#allocation11 + $0x10] sm:$0xff]
    %v178 = vld [vmem:[#allocation11 + $0x18] sm:$0xff]
    %v179 = vld [vmem:[#allocation11 + $0x20] sm:$0xff]
    %v180 = vld [vmem:[#allocation11 + $0x28] sm:$0xff]
    %v181 = vld [vmem:[#allocation11 + $0x30] sm:$0xff]
    %v182 = vld [vmem:[#allocation11 + $0x38] sm:$0xff]
    %v183 = vld [vmem:[#allocation11 + $0x40] sm:$0xff]
    %v184 = vld [vmem:[#allocation11 + $0x48] sm:$0xff]
    %v185 = vld [vmem:[#allocation11 + $0x50] sm:$0xff]
    %v186 = vld [vmem:[#allocation11 + $0x58] sm:$0xff]
    %v187 = vld [vmem:[#allocation11 + $0x60] sm:$0xff]
    %v188 = vld [vmem:[#allocation11 + $0x68] sm:$0xff]
    %v189 = vld [vmem:[#allocation11 + $0x70] sm:$0xff]
    %v190 = vld [vmem:[#allocation11 + $0x78] sm:$0xff]
    %v191 = vld [vmem:[%s6] sm:$0xf]
    %v193 = vlaneseq
    %v194 = vshrl.u32 %v193, 7
    %v195 = vsub.s32 0, %v194
    %v196 = vrot.slane %v191, %v195
    %v197 = vlaneseq
    %v198 = vshrl.u32 %v197, 7
    %v199 = vsub.s32 1, %v198
    %v200 = vrot.slane %v191, %v199
    %v201 = vlaneseq
    %v202 = vshrl.u32 %v201, 7
    %v203 = vsub.s32 2, %v202
    %v204 = vrot.slane %v191, %v203
    %v205 = vlaneseq
    %v206 = vshrl.u32 %v205, 7
    %v207 = vsub.s32 3, %v206
    %v208 = vrot.slane %v191, %v207
    %v214 = vsel %vm106, %v174, 0
    %216 = vmatprep.subr.mxu0 0.0
    %217 = vmatpush1.msra.mxu0 0.0
    %218 = vmatprep.subr.mxu0 0.0
    %219 = vmatpush1.msra.mxu0 0.0
    %220 = vmatprep.subr.mxu0 0.0
    %221 = vmatpush1.msra.mxu0 0.0
    %222 = vmatprep.subr.mxu0 0.0
    %223 = vmatpush1.msra.mxu0 0.0
    %224 = vmatprep.subr.mxu0 0.0
    %225 = vmatpush1.msra.mxu0 0.0
    %226 = vmatprep.subr.mxu0 0.0
    %227 = vmatpush1.msra.mxu0 0.0
    %228 = vmatprep.subr.mxu0 0.0
    %229 = vmatpush1.msra.mxu0 0.0
    %230 = vmatprep.subr.mxu0 0.0
    %231 = vmatpush1.msra.mxu0 0.0
    %232 = vmatprep.subr.mxu0 0.0
    %233 = vmatpush1.msra.mxu0 0.0
    %234 = vmatprep.subr.mxu0 0.0
    %235 = vmatpush1.msra.mxu0 0.0
    %236 = vmatprep.subr.mxu0 0.0
    %237 = vmatpush1.msra.mxu0 0.0
    %238 = vmatprep.subr.mxu0 0.0
    %239 = vmatpush1.msra.mxu0 0.0
    %240 = vmatprep.subr.mxu0 %v188
    %241 = vmatpush1.msra.mxu0 %v187
    %242 = vmatprep.subr.mxu0 %v184
    %243 = vmatpush1.msra.mxu0 %v183
    %244 = vmatprep.subr.mxu0 %v180
    %245 = vmatpush1.msra.mxu0 %v179
    %246 = vmatprep.subr.mxu0 %v176
    %247 = vmatpush1.msra.mxu0 %v175
    %248 = vmatprep.subr.mxu0 0.0
    %249 = vmatpush2.msra.mxu0 0.0
    %250 = vmatprep.subr.mxu0 0.0
    %251 = vmatpush2.msra.mxu0 0.0
    %252 = vmatprep.subr.mxu0 0.0
    %253 = vmatpush2.msra.mxu0 0.0
    %254 = vmatprep.subr.mxu0 0.0
    %255 = vmatpush2.msra.mxu0 0.0
    %256 = vmatprep.subr.mxu0 0.0
    %257 = vmatpush2.msra.mxu0 0.0
    %258 = vmatprep.subr.mxu0 0.0
    %259 = vmatpush2.msra.mxu0 0.0
    %260 = vmatprep.subr.mxu0 0.0
    %261 = vmatpush2.msra.mxu0 0.0
    %262 = vmatprep.subr.mxu0 0.0
    %263 = vmatpush2.msra.mxu0 0.0
    %264 = vmatprep.subr.mxu0 0.0
    %265 = vmatpush2.msra.mxu0 0.0
    %266 = vmatprep.subr.mxu0 0.0
    %267 = vmatpush2.msra.mxu0 0.0
    %268 = vmatprep.subr.mxu0 0.0
    %269 = vmatpush2.msra.mxu0 0.0
    %270 = vmatprep.subr.mxu0 0.0
    %271 = vmatpush2.msra.mxu0 0.0
    %272 = vmatprep.subr.mxu0 0.0
    %273 = vmatpush2.msra.mxu0 0.0
    %274 = vmatprep.subr.mxu0 0.0
    %275 = vmatpush2.msra.mxu0 0.0
    %276 = vmatprep.subr.mxu0 0.0
    %277 = vmatpush2.msra.mxu0 0.0
    %278 = vmatprep.subr.mxu0 0.0
    %279 = vmatpush2.msra.mxu0 0.0
    %280 = vmatprep.mubr.f32.mxu0 0.0
    %281 = vmatmul.mubr.f32.gmra.mxu0 %v214
    %v282 = vpop.f32.mrf.mxu0
    %v283 = vadd.f32 %v196, %v282
    %v284 = vpop.f32.mrf.mxu0
    %v285 = vadd.f32 %v200, %v284
    %286 = vdwg.mxu0
    %287 = vmatprep.subr.mxu0 0.0
    %288 = vmatpush1.msra.mxu0 0.0
    %289 = vmatprep.subr.mxu0 0.0
    %290 = vmatpush1.msra.mxu0 0.0
    %291 = vmatprep.subr.mxu0 0.0
    %292 = vmatpush1.msra.mxu0 0.0
    %293 = vmatprep.subr.mxu0 0.0
    %294 = vmatpush1.msra.mxu0 0.0
    %295 = vmatprep.subr.mxu0 0.0
    %296 = vmatpush1.msra.mxu0 0.0
    %297 = vmatprep.subr.mxu0 0.0
    %298 = vmatpush1.msra.mxu0 0.0
    %299 = vmatprep.subr.mxu0 0.0
    %300 = vmatpush1.msra.mxu0 0.0
    %301 = vmatprep.subr.mxu0 0.0
    %302 = vmatpush1.msra.mxu0 0.0
    %303 = vmatprep.subr.mxu0 0.0
    %304 = vmatpush1.msra.mxu0 0.0
    %305 = vmatprep.subr.mxu0 0.0
    %306 = vmatpush1.msra.mxu0 0.0
    %307 = vmatprep.subr.mxu0 0.0
    %308 = vmatpush1.msra.mxu0 0.0
    %309 = vmatprep.subr.mxu0 0.0
    %310 = vmatpush1.msra.mxu0 0.0
    %311 = vmatprep.subr.mxu0 %v190
    %312 = vmatpush1.msra.mxu0 %v189
    %313 = vmatprep.subr.mxu0 %v186
    %314 = vmatpush1.msra.mxu0 %v185
    %315 = vmatprep.subr.mxu0 %v182
    %316 = vmatpush1.msra.mxu0 %v181
    %317 = vmatprep.subr.mxu0 %v178
    %318 = vmatpush1.msra.mxu0 %v177
    %319 = vmatprep.subr.mxu0 0.0
    %320 = vmatpush2.msra.mxu0 0.0
    %321 = vmatprep.subr.mxu0 0.0
    %322 = vmatpush2.msra.mxu0 0.0
    %323 = vmatprep.subr.mxu0 0.0
    %324 = vmatpush2.msra.mxu0 0.0
    %325 = vmatprep.subr.mxu0 0.0
    %326 = vmatpush2.msra.mxu0 0.0
    %327 = vmatprep.subr.mxu0 0.0
    %328 = vmatpush2.msra.mxu0 0.0
    %329 = vmatprep.subr.mxu0 0.0
    %330 = vmatpush2.msra.mxu0 0.0
    %331 = vmatprep.subr.mxu0 0.0
    %332 = vmatpush2.msra.mxu0 0.0
    %333 = vmatprep.subr.mxu0 0.0
    %334 = vmatpush2.msra.mxu0 0.0
    %335 = vmatprep.subr.mxu0 0.0
    %336 = vmatpush2.msra.mxu0 0.0
    %337 = vmatprep.subr.mxu0 0.0
    %338 = vmatpush2.msra.mxu0 0.0
    %339 = vmatprep.subr.mxu0 0.0
    %340 = vmatpush2.msra.mxu0 0.0
    %341 = vmatprep.subr.mxu0 0.0
    %342 = vmatpush2.msra.mxu0 0.0
    %343 = vmatprep.subr.mxu0 0.0
    %344 = vmatpush2.msra.mxu0 0.0
    %345 = vmatprep.subr.mxu0 0.0
    %346 = vmatpush2.msra.mxu0 0.0
    %347 = vmatprep.subr.mxu0 0.0
    %348 = vmatpush2.msra.mxu0 0.0
    %349 = vmatprep.subr.mxu0 0.0
    %350 = vmatpush2.msra.mxu0 0.0
    %351 = vmatprep.mubr.f32.mxu0 0.0
    %352 = vmatmul.mubr.f32.gmra.mxu0 %v214
    %v353 = vpop.f32.mrf.mxu0
    %v354 = vadd.f32 %v204, %v353
    %v355 = vpop.f32.mrf.mxu0
    %v356 = vadd.f32 %v208, %v355
    %357 = vdwg.mxu0
    %vm358 = vcmp.ge.f32.partialorder %v283, 0.0
    %vm359 = vcmp.ge.f32.partialorder %v285, 0.0
    %vm360 = vcmp.ge.f32.partialorder %v354, 0.0
    %vm361 = vcmp.ge.f32.partialorder %v356, 0.0
    %v362 = vmul.f32 %v283, 0.01
    %v363 = vmul.f32 %v285, 0.01
    %v364 = vmul.f32 %v354, 0.01
    %v365 = vmul.f32 %v356, 0.01
    %v366 = vsel %vm358, %v283, %v362
    %v367 = vsel %vm359, %v285, %v363
    %v368 = vsel %vm360, %v354, %v364
    %v369 = vsel %vm361, %v356, %v365
    %v370 = vrot.slane %v366, 4
    %v371 = vadd.f32 %v366, %v370
    %v372 = vrot.slane %v371, 2
    %v373 = vadd.f32 %v371, %v372
    %v374 = vrot.slane %v373, 1
    %v375 = vadd.f32 %v373, %v374
    %v376 = vrot.slane %v367, 4
    %v377 = vadd.f32 %v367, %v376
    %v378 = vrot.slane %v377, 2
    %v379 = vadd.f32 %v377, %v378
    %v380 = vrot.slane %v379, 1
    %v381 = vadd.f32 %v379, %v380
    %v382 = vrot.slane %v368, 4
    %v383 = vadd.f32 %v368, %v382
    %v384 = vrot.slane %v383, 2
    %v385 = vadd.f32 %v383, %v384
    %v386 = vrot.slane %v385, 1
    %v387 = vadd.f32 %v385, %v386
    %v388 = vrot.slane %v369, 4
    %v389 = vadd.f32 %v369, %v388
    %v390 = vrot.slane %v389, 2
    %v391 = vadd.f32 %v389, %v390
    %v392 = vrot.slane %v391, 1
    %v393 = vadd.f32 %v391, %v392
    %v394 = vmul.f32 %v375, %v144
    %v395 = vmul.f32 %v381, %v144
    %v396 = vmul.f32 %v387, %v144
    %v397 = vmul.f32 %v393, %v144
    %v398 = vsub.f32 %v366, %v394
    %v399 = vsub.f32 %v367, %v395
    %v400 = vsub.f32 %v368, %v396
    %v401 = vsub.f32 %v369, %v397
    %v402 = vmul.f32 %v398, %v398
    %v403 = vmul.f32 %v399, %v399
    %v404 = vmul.f32 %v400, %v400
    %v405 = vmul.f32 %v401, %v401
    %v406 = vrot.slane %v402, 4
    %v407 = vadd.f32 %v402, %v406
    %v408 = vrot.slane %v407, 2
    %v409 = vadd.f32 %v407, %v408
    %v410 = vrot.slane %v409, 1
    %v411 = vadd.f32 %v409, %v410
    %v412 = vrot.slane %v403, 4
    %v413 = vadd.f32 %v403, %v412
    %v414 = vrot.slane %v413, 2
    %v415 = vadd.f32 %v413, %v414
    %v416 = vrot.slane %v415, 1
    %v417 = vadd.f32 %v415, %v416
    %v418 = vrot.slane %v404, 4
    %v419 = vadd.f32 %v404, %v418
    %v420 = vrot.slane %v419, 2
    %v421 = vadd.f32 %v419, %v420
    %v422 = vrot.slane %v421, 1
    %v423 = vadd.f32 %v421, %v422
    %v424 = vrot.slane %v405, 4
    %v425 = vadd.f32 %v405, %v424
    %v426 = vrot.slane %v425, 2
    %v427 = vadd.f32 %v425, %v426
    %v428 = vrot.slane %v427, 1
    %v429 = vadd.f32 %v427, %v428
    %v430 = vmul.f32 %v411, %v144
    %v431 = vmul.f32 %v417, %v144
    %v432 = vmul.f32 %v423, %v144
    %v433 = vmul.f32 %v429, %v144
    %v434 = vadd.f32 %v430, 1e-05
    %v435 = vadd.f32 %v431, 1e-05
    %v436 = vadd.f32 %v432, 1e-05
    %v437 = vadd.f32 %v433, 1e-05
    %v438 = vrsqrt.pop %v434
    %v439 = vrsqrt.pop %v435
    %v440 = vrsqrt.pop %v436
    %v441 = vrsqrt.pop %v437
    %v442 = vmul.f32 %v398, %v438
    %v443 = vmul.f32 %v399, %v439
    %v444 = vmul.f32 %v400, %v440
    %v445 = vmul.f32 %v401, %v441
    %v446 = vld [vmem:[%s7] sm:$0xf]
    %v448 = vlaneseq
    %v449 = vshrl.u32 %v448, 7
    %v450 = vsub.s32 0, %v449
    %v451 = vrot.slane %v446, %v450
    %v452 = vlaneseq
    %v453 = vshrl.u32 %v452, 7
    %v454 = vsub.s32 1, %v453
    %v455 = vrot.slane %v446, %v454
    %v456 = vlaneseq
    %v457 = vshrl.u32 %v456, 7
    %v458 = vsub.s32 2, %v457
    %v459 = vrot.slane %v446, %v458
    %v460 = vlaneseq
    %v461 = vshrl.u32 %v460, 7
    %v462 = vsub.s32 3, %v461
    %v463 = vrot.slane %v446, %v462
    %v468 = vmul.f32 %v442, %v451
    %v469 = vmul.f32 %v443, %v455
    %v470 = vmul.f32 %v444, %v459
    %v471 = vmul.f32 %v445, %v463
    %v472 = vld [vmem:[%s8] sm:$0xf]
    %v474 = vlaneseq
    %v475 = vshrl.u32 %v474, 7
    %v476 = vsub.s32 0, %v475
    %v477 = vrot.slane %v472, %v476
    %v478 = vlaneseq
    %v479 = vshrl.u32 %v478, 7
    %v480 = vsub.s32 1, %v479
    %v481 = vrot.slane %v472, %v480
    %v482 = vlaneseq
    %v483 = vshrl.u32 %v482, 7
    %v484 = vsub.s32 2, %v483
    %v485 = vrot.slane %v472, %v484
    %v486 = vlaneseq
    %v487 = vshrl.u32 %v486, 7
    %v488 = vsub.s32 3, %v487
    %v489 = vrot.slane %v472, %v488
    %v494 = vadd.f32 %v468, %v477
    %v495 = vadd.f32 %v469, %v481
    %v496 = vadd.f32 %v470, %v485
    %v497 = vadd.f32 %v471, %v489
    %v498 = vpack.c.bf16 %v494, %v494
    %v499 = vpack.c.bf16 %v495, %v495
    %v500 = vpack.c.bf16 %v496, %v496
    %v501 = vpack.c.bf16 %v497, %v497
    %v506 = vunpack.c.l.b16 %v498
    %v507 = vunpack.c.l.b16 %v499
    %v508 = vunpack.c.l.b16 %v500
    %v509 = vunpack.c.l.b16 %v501
    %v510 = vpack.c.b16 %v507, %v506
    %v511 = vpack.c.b16 %v509, %v508
    %514 = vst [vmem:[#allocation13] sm:$0xff] %v510
    %515 = vst [vmem:[#allocation13 + $0x8] sm:$0xff] %v511
    // Predicated region
    $region62: #{tpu_custom_call.1} parent=1 // pred_check
      _
    $region63: #{tpu_custom_call.1} parent=1 // pred_check_branch
      %517 = sbr.rel (0) target = $region65
    $region64: #{tpu_custom_call.1} parent=1 // pred_region
      %s519 = ssub.s32 256, 256
      %520 = vsyncadd [#allocation4], %s519
      %s522 = sshll.u32 [#allocation13], 4
      %s523 = int_to_ptr.vmem [resolvable:$true] %s522
      %525 = dma.vmem_to_hbm [thread:$0]  %s523, 256, %s9, [#allocation4]
    $region65: #{tpu_custom_call.1} parent=1 // pred_fallthru
      _
    // Predicated region
    $region66: #{tpu_custom_call.1} parent=1 // pred_check
      _
    $region67: #{tpu_custom_call.1} parent=1 // pred_check_branch
      %527 = sbr.rel (0) target = $region69
    $region68: #{tpu_custom_call.1} parent=1 // pred_region
      %528 = dma.done [#allocation4], 256
    $region69: #{tpu_custom_call.1} parent=1 // pred_fallthru
      _
    %529 = vsyncpa [#allocation3], 1
    %530 = vsyncpa [#allocation6], 1
    %531 = vsyncpa [#allocation9], 1
    %532 = vsyncpa [#allocation12], 1
    %533 = vsyncpa [#allocation4], 1

</llo_original>
